<compile_context>
chip_gen: v7x
topology: tpu7x:2x2x1
jax: 0.10.0
libtpu: 0.0.40
codegen_flags: <defaults>
</compile_context>

<pallas_src>
import functools

import jax
import jax.numpy as jnp
from jax import lax
from jax.experimental import pallas as pl
from jax.experimental.pallas import tpu as pltpu


def _pick_tile(hw, max_tile=32768):
    """Largest lane tile <= max_tile that is a multiple of 128 and divides hw.

    Falls back to the full hw (single tile) when hw is small or indivisible.
    """
    if hw <= max_tile:
        return hw
    t = (max_tile // 128) * 128
    while t >= 128:
        if hw % t == 0:
            return t
        t -= 128
    return hw


# ---------------------------------------------------------------------------
# Pass 1: softmax -> binarize -> accumulate palette means v (output-resident)
# ---------------------------------------------------------------------------
def _binarize_vacc_kernel(x_ref, logit_ref, b_ref, v_ref, *, hw_total, num_ch):
    t = pl.program_id(1)
    nt = pl.num_programs(1)

    @pl.when(t == 0)
    def _():
        v_ref[...] = jnp.zeros_like(v_ref)

    logits = logit_ref[0]                                 # (C, T)

    # ---- softmax over channel dim (torch dim=1 == sublane axis here) ----
    m = jnp.max(logits, axis=0, keepdims=True)
    e = jnp.exp(logits - m)
    b = e / jnp.sum(e, axis=0, keepdims=True)

    # ---- binarize exactly as in the torch code ----
    mx = jnp.max(b, axis=0, keepdims=True)                # "_" per-pixel max
    mask = (b - mx * 0.5) == (mx * 0.5)                   # argmax one-hot (ties kept)
    b = b * mask.astype(b.dtype)
    b = b / mx
    b_ref[0] = b

    # ---- partial palette sums, accumulated in the resident (1,C,C) block ----
    # Layout: v_ref[0, k, ch] = sum_p x[ch, p] * b[k, p]   (i.e. v transposed).
    # 3 sublane-broadcast multiplies (VPU) + 3 lane reductions (XLU); no MXU,
    # no transpose of the (C, T) slabs.
    x = x_ref[0]                                          # (C, T)
    cols = []
    for ch in range(num_ch):
        prod = x[ch:ch + 1, :] * b                        # (C, T)
        cols.append(jnp.sum(prod, axis=1, keepdims=True))  # (C, 1)
    v_ref[0] += jnp.concatenate(cols, axis=1)             # (C, C)

    @pl.when(t == nt - 1)
    def _():
        # turn the accumulated sums into means (divide by total pixel count)
        v_ref[...] = v_ref[...] * (1.0 / hw_total)


# ---------------------------------------------------------------------------
# Pass 2: result[ch, :] = sum_k v[ch, k] * b[k, :]   (pure VPU/XLU, no MXU)
# ---------------------------------------------------------------------------
def _palette_apply_kernel(v_ref, b_ref, res_ref, *, num_ch):
    v_t = v_ref[0]                                        # (C, C): v_t[k, ch]
    b = b_ref[0]                                          # (C, T)
    rows = []
    for ch in range(num_ch):
        coef = v_t[:, ch:ch + 1]                          # (C, 1) coeffs for out-chan ch
        rows.append(jnp.sum(coef * b, axis=0, keepdims=True))  # (1, T)
    res_ref[0] = jnp.concatenate(rows, axis=0)            # (C, T)


# ---------------------------------------------------------------------------
# Wrapper
# ---------------------------------------------------------------------------
def spnet_forward(x_nchw, seg_w, seg_b, *, max_tile=32768):
    """SPNet forward ('new_version', num_palette=3).

    x_nchw: (B, 3, H, W) float32. Returns (b, result), both (B, 3, H, W).
    """
    B, C, H, W = x_nchw.shape
    HW = H * W
    T = _pick_tile(HW, max_tile)
    n_tiles = HW // T

    # TODO(synk): the real segmentation backbone (unt_rdefnet152) is not in the
    # reference source; a deterministic 3x3 conv (C -> num_palette=3, stride 1,
    # pad 1) stands in for `self.seg(x)`.
    # TODO(synk): fusing this conv into pass 1 (9 shifted FMAs + row halos)
    # would cut ~40% of HBM traffic, but needs exact halo handling at tile
    # seams; left as a plain XLA conv for now.
    logits = lax.conv_general_dilated(
        x_nchw, seg_w, window_strides=(1, 1), padding=((1, 1), (1, 1)),
        dimension_numbers=("NCHW", "OIHW", "NCHW"))
    logits = logits + seg_b[None, :, None, None]

    x_flat = x_nchw.reshape(B, C, HW).astype(jnp.float32)
    l_flat = logits.reshape(B, C, HW).astype(jnp.float32)

    tile_spec = pl.BlockSpec((1, C, T), lambda b, t: (b, 0, t))
    v_spec = pl.BlockSpec((1, C, C), lambda b, t: (b, 0, 0))

    kernel1 = functools.partial(_binarize_vacc_kernel, hw_total=HW, num_ch=C)
    b_flat, v_t = pl.pallas_call(
        kernel1,
        grid=(B, n_tiles),
        in_specs=[tile_spec, tile_spec],
        out_specs=[tile_spec, v_spec],
        out_shape=[jax.ShapeDtypeStruct((B, C, HW), jnp.float32),
                   jax.ShapeDtypeStruct((B, C, C), jnp.float32)],
        compiler_params=pltpu.CompilerParams(
            dimension_semantics=("parallel", "arbitrary"),
            vmem_limit_bytes=32 * 1024 * 1024),
    )(x_flat, l_flat)

    kernel2 = functools.partial(_palette_apply_kernel, num_ch=C)
    res_flat = pl.pallas_call(
        kernel2,
        grid=(B, n_tiles),
        in_specs=[v_spec, tile_spec],
        out_specs=tile_spec,
        out_shape=jax.ShapeDtypeStruct((B, C, HW), jnp.float32),
        compiler_params=pltpu.CompilerParams(
            dimension_semantics=("parallel", "parallel"),
            vmem_limit_bytes=32 * 1024 * 1024),
    )(v_t, b_flat)

    return b_flat.reshape(B, C, H, W), res_flat.reshape(B, C, H, W)


def spnet_reference(x_nchw, seg_w, seg_b):
    """Pure-JAX reference mirroring the PyTorch forward (for validation)."""
    B, C, H, W = x_nchw.shape
    logits = lax.conv_general_dilated(
        x_nchw, seg_w, window_strides=(1, 1), padding=((1, 1), (1, 1)),
        dimension_numbers=("NCHW", "OIHW", "NCHW"))
    logits = logits + seg_b[None, :, None, None]
    b = jax.nn.softmax(logits, axis=1)
    mx = jnp.max(b, axis=1, keepdims=True)
    mask = (b - mx / 2) == (mx / 2)
    b = b * mask.astype(b.dtype)
    b = b / mx
    xb = x_nchw.reshape(B, C, -1)
    bb = b.reshape(B, C, -1)
    v = jnp.einsum("ncp,nkp->nck", xb, bb) / (H * W)
    result = jnp.einsum("nck,nkp->ncp", v, bb).reshape(B, C, H, W)
    return b, result


if __name__ == "__main__":
    key = jax.random.PRNGKey(0)
    kx, kw, kb = jax.random.split(key, 3)

    B, C, H, W = 2, 3, 16, 16          # num_palette = 3 (seg outputs 3 channels)
    x = jax.random.normal(kx, (B, C, H, W), dtype=jnp.float32)
    seg_w = 0.1 * jax.random.normal(kw, (3, 3, 3, 3), dtype=jnp.float32)  # OIHW
    seg_b = 0.05 * jax.random.normal(kb, (3,), dtype=jnp.float32)

    b_out, result = spnet_forward(x, seg_w, seg_b)
    jax.block_until_ready((b_out, result))

    b_ref, r_ref = spnet_reference(x, seg_w, seg_b)
    assert jnp.allclose(b_out, b_ref, atol=1e-5, rtol=1e-5), "binarize mismatch"
    assert jnp.allclose(result, r_ref, atol=1e-5, rtol=1e-5), "palette mismatch"

    print("KERNEL_OK")
</pallas_src>

<mosaic_0001>
module attributes {stable_mosaic.version = 11 : i64} {
  func.func @_binarize_vacc_kernel(%arg0: i32, %arg1: i32, %arg2: memref<1x3x256xf32, #tpu.memory_space<vmem>>, %arg3: memref<1x3x256xf32, #tpu.memory_space<vmem>>, %arg4: memref<1x3x256xf32, #tpu.memory_space<vmem>>, %arg5: memref<1x3x3xf32, #tpu.memory_space<vmem>>) attributes {dimension_semantics = [#tpu.dimension_semantics<parallel>, #tpu.dimension_semantics<arbitrary>], iteration_bounds = array<i64: 2, 1>, scalar_prefetch = 0 : i64, scratch_operands = 0 : i64, tpu.core_type = #tpu.core_type<tc>, window_params = [{transform_indices = @transform_0, window_bounds = array<i64: 1, 3, 256>}, {transform_indices = @transform_1, window_bounds = array<i64: 1, 3, 256>}, {transform_indices = @transform_2, window_bounds = array<i64: 1, 3, 256>}, {transform_indices = @transform_3, window_bounds = array<i64: 1, 3, 3>}]} {
    %c0_i32 = arith.constant 0 : i32
    %0 = arith.cmpi eq, %arg1, %c0_i32 : i32
    %1 = arith.extui %0 : i1 to i32
    %c0_i32_0 = arith.constant 0 : i32
    %2 = arith.cmpi ne, %1, %c0_i32_0 : i32
    scf.if %2 {
      %cst_24 = arith.constant 0.000000e+00 : f32
      %59 = vector.broadcast %cst_24 : f32 to vector<1x3x3xf32>
      %c0_25 = arith.constant 0 : index
      %c0_26 = arith.constant 0 : index
      %c0_27 = arith.constant 0 : index
      %60 = vector.load %arg5[%c0_25, %c0_26, %c0_27] : memref<1x3x3xf32, #tpu.memory_space<vmem>>, vector<1x3x3xf32>
      tpu.vector_store %arg5[%c0_25, %c0_26, %c0_27], %59 {strides = array<i32>} : memref<1x3x3xf32, #tpu.memory_space<vmem>>, vector<1x3x3xf32>,
    } else {
    }
    %c0 = arith.constant 0 : index
    %c0_1 = arith.constant 0 : index
    %c0_2 = arith.constant 0 : index
    %3 = vector.load %arg3[%c0, %c0_1, %c0_2] : memref<1x3x256xf32, #tpu.memory_space<vmem>>, vector<1x3x256xf32>
    %4 = vector.shape_cast %3 : vector<1x3x256xf32> to vector<3x256xf32>
    %cst = arith.constant dense<0xFF800000> : vector<256xf32>
    %5 = vector.multi_reduction <maximumf>, %4, %cst [0] : vector<3x256xf32> to vector<256xf32>
    %6 = vector.shape_cast %5 : vector<256xf32> to vector<1x256xf32>
    %7 = vector.broadcast %6 : vector<1x256xf32> to vector<3x256xf32>
    %8 = arith.subf %4, %7 : vector<3x256xf32>
    %9 = math.exp %8 : vector<3x256xf32>
    %cst_3 = arith.constant dense<0.000000e+00> : vector<256xf32>
    %10 = vector.multi_reduction <add>, %9, %cst_3 [0] : vector<3x256xf32> to vector<256xf32>
    %11 = vector.shape_cast %10 : vector<256xf32> to vector<1x256xf32>
    %12 = vector.broadcast %11 : vector<1x256xf32> to vector<3x256xf32>
    %13 = arith.divf %9, %12 : vector<3x256xf32>
    %cst_4 = arith.constant dense<0xFF800000> : vector<256xf32>
    %14 = vector.multi_reduction <maximumf>, %13, %cst_4 [0] : vector<3x256xf32> to vector<256xf32>
    %15 = vector.shape_cast %14 : vector<256xf32> to vector<1x256xf32>
    %cst_5 = arith.constant 5.000000e-01 : f32
    %16 = vector.broadcast %cst_5 : f32 to vector<1x256xf32>
    %17 = arith.mulf %15, %16 : vector<1x256xf32>
    %18 = vector.broadcast %17 : vector<1x256xf32> to vector<3x256xf32>
    %19 = arith.subf %13, %18 : vector<3x256xf32>
    %cst_6 = arith.constant 5.000000e-01 : f32
    %20 = vector.broadcast %cst_6 : f32 to vector<1x256xf32>
    %21 = arith.mulf %15, %20 : vector<1x256xf32>
    %22 = vector.broadcast %21 : vector<1x256xf32> to vector<3x256xf32>
    %23 = arith.cmpf oeq, %19, %22 : vector<3x256xf32>
    %24 = arith.extui %23 : vector<3x256xi1> to vector<3x256xi32>
    %25 = arith.sitofp %24 : vector<3x256xi32> to vector<3x256xf32>
    %26 = arith.mulf %13, %25 : vector<3x256xf32>
    %27 = vector.broadcast %15 : vector<1x256xf32> to vector<3x256xf32>
    %28 = arith.divf %26, %27 : vector<3x256xf32>
    %c0_7 = arith.constant 0 : index
    %c0_8 = arith.constant 0 : index
    %c0_9 = arith.constant 0 : index
    %29 = vector.load %arg4[%c0_7, %c0_8, %c0_9] : memref<1x3x256xf32, #tpu.memory_space<vmem>>, vector<1x3x256xf32>
    %30 = vector.shape_cast %29 : vector<1x3x256xf32> to vector<3x256xf32>
    %31 = vector.shape_cast %28 : vector<3x256xf32> to vector<1x3x256xf32>
    tpu.vector_store %arg4[%c0_7, %c0_8, %c0_9], %31 {strides = array<i32>} : memref<1x3x256xf32, #tpu.memory_space<vmem>>, vector<1x3x256xf32>,
    %c0_10 = arith.constant 0 : index
    %c0_11 = arith.constant 0 : index
    %c0_12 = arith.constant 0 : index
    %32 = vector.load %arg2[%c0_10, %c0_11, %c0_12] : memref<1x3x256xf32, #tpu.memory_space<vmem>>, vector<1x3x256xf32>
    %33 = vector.shape_cast %32 : vector<1x3x256xf32> to vector<3x256xf32>
    %34 = vector.extract_strided_slice %33 {offsets = [0, 0], sizes = [1, 256], strides = [1, 1]} : vector<3x256xf32> to vector<1x256xf32>
    %35 = vector.broadcast %34 : vector<1x256xf32> to vector<3x256xf32>
    %36 = arith.mulf %35, %28 : vector<3x256xf32>
    %cst_13 = arith.constant dense<0.000000e+00> : vector<3xf32>
    %37 = vector.multi_reduction <add>, %36, %cst_13 [1] : vector<3x256xf32> to vector<3xf32>
    %38 = vector.shape_cast %37 : vector<3xf32> to vector<3x1xf32>
    %39 = vector.extract_strided_slice %33 {offsets = [1, 0], sizes = [1, 256], strides = [1, 1]} : vector<3x256xf32> to vector<1x256xf32>
    %40 = vector.broadcast %39 : vector<1x256xf32> to vector<3x256xf32>
    %41 = arith.mulf %40, %28 : vector<3x256xf32>
    %cst_14 = arith.constant dense<0.000000e+00> : vector<3xf32>
    %42 = vector.multi_reduction <add>, %41, %cst_14 [1] : vector<3x256xf32> to vector<3xf32>
    %43 = vector.shape_cast %42 : vector<3xf32> to vector<3x1xf32>
    %44 = vector.extract_strided_slice %33 {offsets = [2, 0], sizes = [1, 256], strides = [1, 1]} : vector<3x256xf32> to vector<1x256xf32>
    %45 = vector.broadcast %44 : vector<1x256xf32> to vector<3x256xf32>
    %46 = arith.mulf %45, %28 : vector<3x256xf32>
    %cst_15 = arith.constant dense<0.000000e+00> : vector<3xf32>
    %47 = vector.multi_reduction <add>, %46, %cst_15 [1] : vector<3x256xf32> to vector<3xf32>
    %48 = vector.shape_cast %47 : vector<3xf32> to vector<3x1xf32>
    %c0_16 = arith.constant 0 : index
    %c0_17 = arith.constant 0 : index
    %c0_18 = arith.constant 0 : index
    %49 = vector.load %arg5[%c0_16, %c0_17, %c0_18] : memref<1x3x3xf32, #tpu.memory_space<vmem>>, vector<1x3x3xf32>
    %50 = vector.shape_cast %49 : vector<1x3x3xf32> to vector<3x3xf32>
    %51 = tpu.concatenate %38, %43, %48 in 1 : vector<3x1xf32>, vector<3x1xf32>, vector<3x1xf32> -> vector<3x3xf32>
    %52 = arith.addf %50, %51 : vector<3x3xf32>
    %c0_19 = arith.constant 0 : index
    %c0_20 = arith.constant 0 : index
    %c0_21 = arith.constant 0 : index
    %53 = vector.load %arg5[%c0_19, %c0_20, %c0_21] : memref<1x3x3xf32, #tpu.memory_space<vmem>>, vector<1x3x3xf32>
    %54 = vector.shape_cast %53 : vector<1x3x3xf32> to vector<3x3xf32>
    %55 = vector.shape_cast %52 : vector<3x3xf32> to vector<1x3x3xf32>
    tpu.vector_store %arg5[%c0_19, %c0_20, %c0_21], %55 {strides = array<i32>} : memref<1x3x3xf32, #tpu.memory_space<vmem>>, vector<1x3x3xf32>,
    %c0_i32_22 = arith.constant 0 : i32
    %56 = arith.cmpi eq, %arg1, %c0_i32_22 : i32
    %57 = arith.extui %56 : i1 to i32
    %c0_i32_23 = arith.constant 0 : i32
    %58 = arith.cmpi ne, %57, %c0_i32_23 : i32
    scf.if %58 {
      %c0_24 = arith.constant 0 : index
      %c0_25 = arith.constant 0 : index
      %c0_26 = arith.constant 0 : index
      %59 = vector.load %arg5[%c0_24, %c0_25, %c0_26] : memref<1x3x3xf32, #tpu.memory_space<vmem>>, vector<1x3x3xf32>
      %cst_27 = arith.constant 3.906250e-03 : f32
      %60 = vector.broadcast %cst_27 : f32 to vector<1x3x3xf32>
      %61 = arith.mulf %59, %60 : vector<1x3x3xf32>
      %c0_28 = arith.constant 0 : index
      %c0_29 = arith.constant 0 : index
      %c0_30 = arith.constant 0 : index
      %62 = vector.load %arg5[%c0_28, %c0_29, %c0_30] : memref<1x3x3xf32, #tpu.memory_space<vmem>>, vector<1x3x3xf32>
      tpu.vector_store %arg5[%c0_28, %c0_29, %c0_30], %61 {strides = array<i32>} : memref<1x3x3xf32, #tpu.memory_space<vmem>>, vector<1x3x3xf32>,
    } else {
    }
    return
  }
  func.func @transform_0(%arg0: i32, %arg1: i32) -> (i32, i32, i32) {
    %c0_i32 = arith.constant 0 : i32
    %c0_i32_0 = arith.constant 0 : i32
    return %arg0, %c0_i32, %arg1 : i32, i32, i32
  }
  func.func @transform_1(%arg0: i32, %arg1: i32) -> (i32, i32, i32) {
    %c0_i32 = arith.constant 0 : i32
    %c0_i32_0 = arith.constant 0 : i32
    return %arg0, %c0_i32, %arg1 : i32, i32, i32
  }
  func.func @transform_2(%arg0: i32, %arg1: i32) -> (i32, i32, i32) {
    %c0_i32 = arith.constant 0 : i32
    %c0_i32_0 = arith.constant 0 : i32
    return %arg0, %c0_i32, %arg1 : i32, i32, i32
  }
  func.func @transform_3(%arg0: i32, %arg1: i32) -> (i32, i32, i32) {
    %c0_i32 = arith.constant 0 : i32
    %c0_i32_0 = arith.constant 0 : i32
    %c0_i32_1 = arith.constant 0 : i32
    return %arg0, %c0_i32, %c0_i32_0 : i32, i32, i32
  }
}

</mosaic_0001>

<llo_original>
// kernel: tpu_custom_call.1
$region0: #{tpu_custom_call.1}
  #allocation0 [shape = 'u32[]', space=smem, size = 0x4, offset = 0x4, fixed_abs, tag = 'smem constant byte address 0x4 - core index']
  #allocation1 [shape = 'u32[144,128]{1,0:T(1,128)}', space=vmem, size = 0x12000, scoped, tag = 'internal scratch']
  %s0 = inlined_call_operand.vmem [shape: f32[2,3,256], index: 0, kind: input, shape index: {}]
  %s1 = inlined_call_operand.vmem [shape: f32[2,3,256], index: 1, kind: input, shape index: {}]
  %s2 = inlined_call_operand.vmem [shape: f32[2,3,256], index: 2, kind: output, shape index: {0}]
  %s3 = inlined_call_operand.vmem [shape: f32[2,3,3], index: 3, kind: output, shape index: {1}]
  %4 = xla_tuple %s2, %s3
  %s5 = sld [smem:[#allocation0]]
  $region57: #{tpu_custom_call.1} parent=0
    _
  %s7 = ssub.s32 1, %s5
  %s8 = scalar_select 0, %s7, %s5
  loop: start=0, step=1, limit=4
  $region2: #{tpu_custom_call.1} parent=0 // loop_pre_header
    _
  $region3: #{tpu_custom_call.1} parent=0 // loop_header
    %s10 = sphi 0, %s14
    %p11 = scmp.ge.s32.totalorder %s10, 4
    %s17 = sphi 0, %s29
    %s18 = sphi 0, %s25
    %s19 = sphi 0, %s17
    %s20 = sphi 0, %s18
    %s21 = sphi 0, %s19
    %s22 = sphi 0, %s20
    %s34 = sphi 0, %s36
    %s37 = sphi 0, %s34
    %s38 = sphi 0, %s37
    %s54 = sphi 0, %s38
    %s62 = sphi 0, %s64
    %s65 = sphi 0, %s62
    %s66 = sphi 0, %s65
    %s82 = sphi 0, %s66
    %s90 = sphi 0, %s92
    %s93 = sphi 0, %s90
    %s94 = sphi 0, %s93
    %s110 = sphi 0, %s94
    %s116 = sphi 0, %s118
    %s119 = sphi 0, %s116
    %s120 = sphi 0, %s119
    %s136 = sphi 0, %s120
  $region4: #{tpu_custom_call.1} parent=0 // loop_header_branch
    %13 = sbr.rel (%p11) target = $region8
  $region5: #{tpu_custom_call.1} parent=0 // loop_body
    %s15 = ssub.s32 %s10, 1
    %s16 = ssub.s32 %s10, 2
    %s23 = sadd.s32 1, %s18
    %p24 = scmp.ge.s32.totalorder %s23, 1
    %s25 = scalar_select %p24, 0, %s23
    %s26 = sadd.s32 1, %s17
    %s27 = scalar_select %p24, %s26, %s17
    %p28 = scmp.ge.s32.totalorder %s27, 2
    %s29 = scalar_select %p28, 0, %s27
    %s30 = ssub.s32 %s17, %s29
    %s31 = ssub.s32 %s18, %s25
    %s32 = sor.u32 %s30, %s31
    %p33 = scmp.eq.s32.totalorder %s32, 0
    %s35 = sadd.s32 %s34, 1
    %s36 = scalar_select %p33, %s34, %s35
    %p39 = pneg %p33
    %p40 = scmp.eq.s32.totalorder %s10, 1
    %p41 = por %p39, %p40
    %p42 = scmp.ne.s32.totalorder %s34, %s37
    %p43 = scmp.eq.s32.totalorder %s10, 0
    %p44 = por %p42, %p43
    %p45 = scmp.ne.s32.totalorder %s34, %s37
    %p46 = scmp.eq.s32.totalorder %s15, 1
    %p47 = por %p45, %p46
    %p48 = scmp.ne.s32.totalorder %s37, %s38
    %p49 = scmp.eq.s32.totalorder %s15, 0
    %p50 = por %p48, %p49
    %p51 = scmp.ne.s32.totalorder %s37, %s38
    %p52 = scmp.eq.s32.totalorder %s16, 1
    %p53 = por %p51, %p52
    %p55 = scmp.ne.s32.totalorder %s38, %s54
    %p56 = scmp.eq.s32.totalorder %s16, 0
    %p57 = por %p55, %p56
    %s58 = ssub.s32 %s17, %s29
    %s59 = ssub.s32 %s18, %s25
    %s60 = sor.u32 %s58, %s59
    %p61 = scmp.eq.s32.totalorder %s60, 0
    %s63 = sadd.s32 %s62, 1
    %s64 = scalar_select %p61, %s62, %s63
    %p67 = pneg %p61
    %p68 = scmp.eq.s32.totalorder %s10, 1
    %p69 = por %p67, %p68
    %p70 = scmp.ne.s32.totalorder %s62, %s65
    %p71 = scmp.eq.s32.totalorder %s10, 0
    %p72 = por %p70, %p71
    %p73 = scmp.ne.s32.totalorder %s62, %s65
    %p74 = scmp.eq.s32.totalorder %s15, 1
    %p75 = por %p73, %p74
    %p76 = scmp.ne.s32.totalorder %s65, %s66
    %p77 = scmp.eq.s32.totalorder %s15, 0
    %p78 = por %p76, %p77
    %p79 = scmp.ne.s32.totalorder %s65, %s66
    %p80 = scmp.eq.s32.totalorder %s16, 1
    %p81 = por %p79, %p80
    %p83 = scmp.ne.s32.totalorder %s66, %s82
    %p84 = scmp.eq.s32.totalorder %s16, 0
    %p85 = por %p83, %p84
    %s86 = ssub.s32 %s17, %s29
    %s87 = ssub.s32 %s18, %s25
    %s88 = sor.u32 %s86, %s87
    %p89 = scmp.eq.s32.totalorder %s88, 0
    %s91 = sadd.s32 %s90, 1
    %s92 = scalar_select %p89, %s90, %s91
    %p95 = pneg %p89
    %p96 = scmp.eq.s32.totalorder %s10, 1
    %p97 = por %p95, %p96
    %p98 = scmp.ne.s32.totalorder %s90, %s93
    %p99 = scmp.eq.s32.totalorder %s10, 0
    %p100 = por %p98, %p99
    %p101 = scmp.ne.s32.totalorder %s90, %s93
    %p102 = scmp.eq.s32.totalorder %s15, 1
    %p103 = por %p101, %p102
    %p104 = scmp.ne.s32.totalorder %s93, %s94
    %p105 = scmp.eq.s32.totalorder %s15, 0
    %p106 = por %p104, %p105
    %p107 = scmp.ne.s32.totalorder %s93, %s94
    %p108 = scmp.eq.s32.totalorder %s16, 1
    %p109 = por %p107, %p108
    %p111 = scmp.ne.s32.totalorder %s94, %s110
    %p112 = scmp.eq.s32.totalorder %s16, 0
    %p113 = por %p111, %p112
    %s114 = ssub.s32 %s17, %s29
    %p115 = scmp.eq.s32.totalorder %s114, 0
    %s117 = sadd.s32 %s116, 1
    %s118 = scalar_select %p115, %s116, %s117
    %p121 = pneg %p115
    %p122 = scmp.eq.s32.totalorder %s10, 1
    %p123 = por %p121, %p122
    %p124 = scmp.ne.s32.totalorder %s116, %s119
    %p125 = scmp.eq.s32.totalorder %s10, 0
    %p126 = por %p124, %p125
    %p127 = scmp.ne.s32.totalorder %s116, %s119
    %p128 = scmp.eq.s32.totalorder %s15, 1
    %p129 = por %p127, %p128
    %p130 = scmp.ne.s32.totalorder %s119, %s120
    %p131 = scmp.eq.s32.totalorder %s15, 0
    %p132 = por %p130, %p131
    %p133 = scmp.ne.s32.totalorder %s119, %s120
    %p134 = scmp.eq.s32.totalorder %s16, 1
    %p135 = por %p133, %p134
    %p137 = scmp.ne.s32.totalorder %s120, %s136
    %p138 = scmp.eq.s32.totalorder %s16, 0
    %p139 = por %p137, %p138
    %p140 = scmp.le.s32.totalorder 1, %s10
    %p141 = scmp.lt.s32.totalorder %s10, 3
    %p142 = pnand %p140, %p141
    %p143 = pneg %p142
    // Predicated region
    $region9: #{tpu_custom_call.1} parent=5 // pred_check
      _
    $region10: #{tpu_custom_call.1} parent=5 // pred_check_branch
      %145 = sbr.rel (%p142) target = $region12
    $region11: #{tpu_custom_call.1} parent=5 // pred_region
      %s146 = ssub.s32 %s10, 1
    $region12: #{tpu_custom_call.1} parent=5 // pred_fallthru
      _
    %p147 = scmp.lt.s32.totalorder %s10, 2
    // Predicated region
    $region13: #{tpu_custom_call.1} parent=5 // pred_check
      %p148 = pneg %p147
    $region14: #{tpu_custom_call.1} parent=5 // pred_check_branch
      %150 = sbr.rel (%p148) target = $region16
    $region15: #{tpu_custom_call.1} parent=5 // pred_region
      // Predicated region
      $region17: #{tpu_custom_call.1} parent=15 // pred_check
        %p151 = pneg %p44
      $region18: #{tpu_custom_call.1} parent=15 // pred_check_branch
        %153 = sbr.rel (%p151) target = $region20
      $region19: #{tpu_custom_call.1} parent=15 // pred_region
        %s154 = smul.u32 2, %s18
        %p155 = scmp.lt.s32.totalorder %s17, 1
        %s156 = scalar_select %p155, %s17, 1
        %p157 = scmp.lt.s32.totalorder %s154, 1
        %s158 = scalar_select %p157, %s154, 1
        %s159 = smul.addr %s156, 2
        %s160 = sadd.s32 %s158, %s159
        %s161 = smul.addr %s160, 4
        %s162 = scalar_lea.vmem %s0, %s161
        %s163 = smul.u32 2, %s18
      $region20: #{tpu_custom_call.1} parent=15 // pred_fallthru
        _
      // Predicated region
      $region21: #{tpu_custom_call.1} parent=15 // pred_check
        %p164 = pneg %p72
      $region22: #{tpu_custom_call.1} parent=15 // pred_check_branch
        %166 = sbr.rel (%p164) target = $region24
      $region23: #{tpu_custom_call.1} parent=15 // pred_region
        %s167 = smul.u32 2, %s18
        %p168 = scmp.lt.s32.totalorder %s17, 1
        %s169 = scalar_select %p168, %s17, 1
        %p170 = scmp.lt.s32.totalorder %s167, 1
        %s171 = scalar_select %p170, %s167, 1
        %s172 = smul.addr %s169, 2
        %s173 = sadd.s32 %s171, %s172
        %s174 = smul.addr %s173, 4
        %s175 = scalar_lea.vmem %s1, %s174
        %s176 = smul.u32 2, %s18
      $region24: #{tpu_custom_call.1} parent=15 // pred_fallthru
        _
    $region16: #{tpu_custom_call.1} parent=5 // pred_fallthru
      _
    %p177 = scmp.le.s32.totalorder 1, %s10
    %p178 = scmp.lt.s32.totalorder %s10, 3
    %p179 = pnand %p177, %p178
    %p180 = pneg %p179
    // Predicated region
    $region25: #{tpu_custom_call.1} parent=5 // pred_check
      _
    $region26: #{tpu_custom_call.1} parent=5 // pred_check_branch
      %182 = sbr.rel (%p179) target = $region28
    $region27: #{tpu_custom_call.1} parent=5 // pred_region
      %s183 = ssub.s32 %s10, 1
      %s184 = smul.u32 2, %s20
      %p185 = scmp.lt.s32.totalorder %s19, 1
      %s186 = scalar_select %p185, %s19, 1
      %p187 = scmp.lt.s32.totalorder %s184, 1
      %s188 = scalar_select %p187, %s184, 1
      %s189 = smul.addr %s186, 2
      %s190 = sadd.s32 %s188, %s189
      %s191 = smul.addr %s190, 4
      %s192 = scalar_lea.vmem %s0, %s191
      %p193 = pneg %p50
      %p194 = pneg %p47
      %s195 = smul.u32 2, %s20
      %p196 = scmp.lt.s32.totalorder %s19, 1
      %s197 = scalar_select %p196, %s19, 1
      %p198 = scmp.lt.s32.totalorder %s195, 1
      %s199 = scalar_select %p198, %s195, 1
      %s200 = smul.addr %s197, 2
      %s201 = sadd.s32 %s199, %s200
      %s202 = smul.addr %s201, 4
      %s203 = scalar_lea.vmem %s1, %s202
      %p204 = pneg %p78
      %p205 = pneg %p75
      %p206 = pneg %p106
      %p207 = pneg %p103
      %s208 = smul.u32 2, %s20
      %p209 = scmp.lt.s32.totalorder %s19, 1
      %s210 = scalar_select %p209, %s19, 1
      %p211 = scmp.lt.s32.totalorder %s208, 1
      %s212 = scalar_select %p211, %s208, 1
      %s213 = smul.addr %s210, 2
      %s214 = sadd.s32 %s212, %s213
      %s215 = smul.addr %s214, 4
      %s216 = scalar_lea.vmem %s2, %s215
      %p217 = pneg %p132
      %p218 = pneg %p129
      %p219 = scmp.lt.s32.totalorder %s19, 1
      %s220 = scalar_select %p219, %s19, 1
      %s221 = smul.addr %s220, 4
      %s222 = scalar_lea.vmem %s3, %s221
      %s223 = smul.u32 2, %s20
      %p224 = scmp.lt.s32.totalorder %s19, 1
      %s225 = scalar_select %p224, %s19, 1
      %p226 = scmp.lt.s32.totalorder %s223, 1
      %s227 = scalar_select %p226, %s223, 1
      %s228 = smul.addr %s225, 2
      %s229 = sadd.s32 %s227, %s228
      %s230 = smul.addr %s229, 4
      %s231 = scalar_lea.vmem %s0, %s230
      %s232 = smul.u32 2, %s20
      %s233 = smul.u32 2, %s20
      %p234 = scmp.lt.s32.totalorder %s19, 1
      %s235 = scalar_select %p234, %s19, 1
      %p236 = scmp.lt.s32.totalorder %s233, 1
      %s237 = scalar_select %p236, %s233, 1
      %s238 = smul.addr %s235, 2
      %s239 = sadd.s32 %s237, %s238
      %s240 = smul.addr %s239, 4
      %s241 = scalar_lea.vmem %s1, %s240
      %s242 = smul.u32 2, %s20
      %s243 = smul.u32 2, %s20
      %p244 = scmp.lt.s32.totalorder %s19, 1
      %s245 = scalar_select %p244, %s19, 1
      %p246 = scmp.lt.s32.totalorder %s243, 1
      %s247 = scalar_select %p246, %s243, 1
      %s248 = smul.addr %s245, 2
      %s249 = sadd.s32 %s247, %s248
      %s250 = smul.addr %s249, 4
      %s251 = scalar_lea.vmem %s2, %s250
      %s252 = smul.u32 2, %s20
      %p253 = scmp.lt.s32.totalorder %s19, 1
      %s254 = scalar_select %p253, %s19, 1
      %s255 = smul.addr %s254, 4
      %s256 = scalar_lea.vmem %s3, %s255
      %p257 = scmp.eq.s32.totalorder %s20, 0
      // Predicated region
      $region29: #{tpu_custom_call.1} parent=27 // pred_check
        %p258 = pneg %p257
      $region30: #{tpu_custom_call.1} parent=27 // pred_check_branch
        %260 = sbr.rel (%p258) target = $region32
      $region31: #{tpu_custom_call.1} parent=27 // pred_region
        %vm261 = vcmask 18432
        %262 = vst.msk [vmem:[%s256] sm:$0x7] %vm261, 0.0
      $region32: #{tpu_custom_call.1} parent=27 // pred_fallthru
        _
      %v263 = vld [vmem:[%s241] sm:$0x77]
      %v265 = vcombine.high %v263, %v263
      %vm267 = vcmask 1042432
      %v268 = vsel %vm267, %v263, -inf
      %v269 = vrot.slane %v268, 4
      %v270 = vmax.f32 %v268, %v269
      %v271 = vrot.slane %v270, 2
      %v272 = vmax.f32 %v270, %v271
      %v273 = vrot.slane %v272, 1
      %v274 = vmax.f32 %v272, %v273
      %v275 = vsel %vm267, %v265, -inf
      %v276 = vrot.slane %v275, 4
      %v277 = vmax.f32 %v275, %v276
      %v278 = vrot.slane %v277, 2
      %v279 = vmax.f32 %v277, %v278
      %v280 = vrot.slane %v279, 1
      %v281 = vmax.f32 %v279, %v280
      %v284 = vcombine.low %v274, %v281
      %v286 = vsub.f32 %v263, %v284
      %v287 = vmul.f32 %v286, 1.442695
      %v288 = vpow.pop %v287
      %v290 = vcombine.high %v288, %v288
      %v292 = vsel %vm267, %v288, 0.0
      %v293 = vrot.slane %v292, 4
      %v294 = vadd.f32 %v292, %v293
      %v295 = vrot.slane %v294, 2
      %v296 = vadd.f32 %v294, %v295
      %v297 = vrot.slane %v296, 1
      %v298 = vadd.f32 %v296, %v297
      %v299 = vsel %vm267, %v290, 0.0
      %v300 = vrot.slane %v299, 4
      %v301 = vadd.f32 %v299, %v300
      %v302 = vrot.slane %v301, 2
      %v303 = vadd.f32 %v301, %v302
      %v304 = vrot.slane %v303, 1
      %v305 = vadd.f32 %v303, %v304
      %v308 = vcombine.low %v298, %v305
      %v310 = vrcp.pop %v308
      %v311 = vmul.f32 %v288, %v310
      %v313 = vcombine.high %v311, %v311
      %v315 = vsel %vm267, %v311, -inf
      %v316 = vrot.slane %v315, 4
      %v317 = vmax.f32 %v315, %v316
      %v318 = vrot.slane %v317, 2
      %v319 = vmax.f32 %v317, %v318
      %v320 = vrot.slane %v319, 1
      %v321 = vmax.f32 %v319, %v320
      %v322 = vsel %vm267, %v313, -inf
      %v323 = vrot.slane %v322, 4
      %v324 = vmax.f32 %v322, %v323
      %v325 = vrot.slane %v324, 2
      %v326 = vmax.f32 %v324, %v325
      %v327 = vrot.slane %v326, 1
      %v328 = vmax.f32 %v326, %v327
      %v329 = vmul.f32 %v321, 0.5
      %v330 = vmul.f32 %v328, 0.5
      %v333 = vcombine.low %v329, %v330
      %v335 = vsub.f32 %v311, %v333
      %vm336 = vcmp.eq.f32.partialorder %v335, %v333
      %v337 = vsel %vm336, 1, 0
      %v338 = vcvt.s32.f32 %v337
      %v339 = vmul.f32 %v311, %v338
      %v342 = vcombine.low %v321, %v328
      %v344 = vrcp.pop %v342
      %v345 = vmul.f32 %v339, %v344
      %346 = vst [vmem:[%s251] sm:$0x77] %v345
      %v347 = vld [vmem:[%s231] sm:$0x77]
      %v349 = vlaneseq
      %v350 = vshrl.u32 %v349, 7
      %v351 = vsub.s32 0, %v350
      %v352 = vrot.slane %v347, %v351
      %v353 = vlaneseq
      %v354 = vshrl.u32 %v353, 7
      %v355 = vsub.s32 4, %v354
      %v356 = vrot.slane %v347, %v355
      %v359 = vlaneseq
      %v360 = vshrl.u32 %v359, 7
      %v361 = vsub.s32 0, %v360
      %v362 = vrot.slane %v352, %v361
      %v363 = vlaneseq
      %v364 = vshrl.u32 %v363, 7
      %v365 = vsub.s32 0, %v364
      %v366 = vrot.slane %v356, %v365
      %v368 = vcombine.high %v345, %v345
      %v370 = vmul.f32 %v362, %v345
      %v371 = vmul.f32 %v366, %v368
      %v372 = vsel %vm267, %v370, 0.0
      %v373 = vsel %vm267, %v371, 0.0
      %v374 = vadd.f32 %v372, %v373
      %375 = vadd.xlane.f32.xlu0 %v374
      %v376 = vpop.xlane.xlu0 %375
      %v377 = vlaneseq
      %v378 = vshrl.u32 %v377, 7
      %v379 = vsub.s32 1, %v378
      %v380 = vrot.slane %v347, %v379
      %v381 = vlaneseq
      %v382 = vshrl.u32 %v381, 7
      %v383 = vsub.s32 5, %v382
      %v384 = vrot.slane %v347, %v383
      %v387 = vlaneseq
      %v388 = vshrl.u32 %v387, 7
      %v389 = vsub.s32 1, %v388
      %v390 = vrot.slane %v380, %v389
      %v391 = vlaneseq
      %v392 = vshrl.u32 %v391, 7
      %v393 = vsub.s32 1, %v392
      %v394 = vrot.slane %v384, %v393
      %v395 = vmul.f32 %v390, %v345
      %v396 = vmul.f32 %v394, %v368
      %v397 = vsel %vm267, %v395, 0.0
      %v398 = vsel %vm267, %v396, 0.0
      %v399 = vadd.f32 %v397, %v398
      %400 = vadd.xlane.f32.xlu0 %v399
      %v401 = vpop.xlane.xlu0 %400
      %v402 = vlaneseq
      %v403 = vshrl.u32 %v402, 7
      %v404 = vsub.s32 2, %v403
      %v405 = vrot.slane %v347, %v404
      %v406 = vlaneseq
      %v407 = vshrl.u32 %v406, 7
      %v408 = vsub.s32 6, %v407
      %v409 = vrot.slane %v347, %v408
      %v412 = vlaneseq
      %v413 = vshrl.u32 %v412, 7
      %v414 = vsub.s32 2, %v413
      %v415 = vrot.slane %v405, %v414
      %v416 = vlaneseq
      %v417 = vshrl.u32 %v416, 7
      %v418 = vsub.s32 2, %v417
      %v419 = vrot.slane %v409, %v418
      %v420 = vmul.f32 %v415, %v345
      %v421 = vmul.f32 %v419, %v368
      %v422 = vsel %vm267, %v420, 0.0
      %v423 = vsel %vm267, %v421, 0.0
      %v424 = vadd.f32 %v422, %v423
      %425 = vadd.xlane.f32.xlu0 %v424
      %v426 = vpop.xlane.xlu0 %425
      %v427 = vld [vmem:[%s256] sm:$0x7]
      %vm428 = vcmask 7168
      %v429 = vsel %vm428, %v376, %v401
      %vm430 = vcmask 15360
      %v431 = vsel %vm430, %v429, %v426
      %v432 = vadd.f32 %v427, %v431
      %vm433 = vcmask 18432
      %434 = vst.msk [vmem:[%s256] sm:$0x7] %vm433, %v432
      // Predicated region
      $region33: #{tpu_custom_call.1} parent=27 // pred_check
        %p435 = pneg %p257
      $region34: #{tpu_custom_call.1} parent=27 // pred_check_branch
        %437 = sbr.rel (%p435) target = $region36
      $region35: #{tpu_custom_call.1} parent=27 // pred_region
        %v438 = vld [vmem:[%s256] sm:$0x7]
        %v439 = vmul.f32 %v438, 0.00390625
        %440 = vst.msk [vmem:[%s256] sm:$0x7] %vm433, %v439
      $region36: #{tpu_custom_call.1} parent=27 // pred_fallthru
        _
      %s441 = smul.u32 2, %s20
      %p442 = scmp.lt.s32.totalorder %s19, 1
      %s443 = scalar_select %p442, %s19, 1
      %p444 = scmp.lt.s32.totalorder %s441, 1
      %s445 = scalar_select %p444, %s441, 1
      %s446 = smul.addr %s443, 2
      %s447 = sadd.s32 %s445, %s446
      %s448 = smul.addr %s447, 4
      %s449 = scalar_lea.vmem %s2, %s448
      %p450 = scmp.lt.s32.totalorder %s19, 1
      %s451 = scalar_select %p450, %s19, 1
      %s452 = smul.addr %s451, 4
      %s453 = scalar_lea.vmem %s3, %s452
      // Predicated region
      $region37: #{tpu_custom_call.1} parent=27 // pred_check
        %p454 = pneg %p103
      $region38: #{tpu_custom_call.1} parent=27 // pred_check_branch
        %456 = sbr.rel (%p454) target = $region40
      $region39: #{tpu_custom_call.1} parent=27 // pred_region
        %s457 = smul.u32 2, %s20
      $region40: #{tpu_custom_call.1} parent=27 // pred_fallthru
        _
      // Predicated region
      $region41: #{tpu_custom_call.1} parent=27 // pred_check
        %p458 = pneg %p129
      $region42: #{tpu_custom_call.1} parent=27 // pred_check_branch
        %460 = sbr.rel (%p458) target = $region44
      $region43: #{tpu_custom_call.1} parent=27 // pred_region
        _
      $region44: #{tpu_custom_call.1} parent=27 // pred_fallthru
        _
    $region28: #{tpu_custom_call.1} parent=5 // pred_fallthru
      _
    %p461 = scmp.le.s32.totalorder 2, %s10
    // Predicated region
    $region45: #{tpu_custom_call.1} parent=5 // pred_check
      %p462 = pneg %p461
    $region46: #{tpu_custom_call.1} parent=5 // pred_check_branch
      %464 = sbr.rel (%p462) target = $region48
    $region47: #{tpu_custom_call.1} parent=5 // pred_region
      %s465 = ssub.s32 %s10, 2
      // Predicated region
      $region49: #{tpu_custom_call.1} parent=47 // pred_check
        %p466 = pneg %p109
      $region50: #{tpu_custom_call.1} parent=47 // pred_check_branch
        %468 = sbr.rel (%p466) target = $region52
      $region51: #{tpu_custom_call.1} parent=47 // pred_region
        %s469 = smul.u32 2, %s22
        %p470 = scmp.lt.s32.totalorder %s21, 1
        %s471 = scalar_select %p470, %s21, 1
        %p472 = scmp.lt.s32.totalorder %s469, 1
        %s473 = scalar_select %p472, %s469, 1
        %s474 = smul.addr %s471, 2
        %s475 = sadd.s32 %s473, %s474
        %s476 = smul.addr %s475, 4
        %s477 = scalar_lea.vmem %s2, %s476
      $region52: #{tpu_custom_call.1} parent=47 // pred_fallthru
        _
      // Predicated region
      $region53: #{tpu_custom_call.1} parent=47 // pred_check
        %p478 = pneg %p135
      $region54: #{tpu_custom_call.1} parent=47 // pred_check_branch
        %480 = sbr.rel (%p478) target = $region56
      $region55: #{tpu_custom_call.1} parent=47 // pred_region
        %p481 = scmp.lt.s32.totalorder %s21, 1
        %s482 = scalar_select %p481, %s21, 1
        %s483 = smul.addr %s482, 4
        %s484 = scalar_lea.vmem %s3, %s483
      $region56: #{tpu_custom_call.1} parent=47 // pred_fallthru
        _
    $region48: #{tpu_custom_call.1} parent=5 // pred_fallthru
      _
  $region6: #{tpu_custom_call.1} parent=0 // loop_footer
    %s14 = sadd.s32 1, %s10
  $region7: #{tpu_custom_call.1} parent=0 // loop_footer_branch
    %9 = sbr.rel target = $region3
  $region8: #{tpu_custom_call.1} parent=0 // loop_exit
    _

</llo_original>
